<compile_context>
chip_gen: v7x
topology: tpu7x:2x2x1
jax: 0.10.0
libtpu: 0.0.40
codegen_flags: <defaults>
</compile_context>

<pallas_src>
import jax
import jax.numpy as jnp
from jax.experimental import pallas as pl
from jax.experimental.pallas import tpu as pltpu

_MIB = 1024 * 1024


def _vmem_capacity_bytes() -> int:
    try:
        return int(pltpu.get_tpu_info().vmem_capacity_bytes)
    except Exception:
        return 64 * _MIB  # conservative default (v7x per-TC VMEM)


def _round_up(x: int, m: int) -> int:
    return -(-x // m) * m


def _pick_col_tile(h: int, cap: int = 2048) -> int:
    """Largest multiple of 128 that divides h, capped (requires h % 128 == 0)."""
    best = 128
    for d in range(128, min(h, cap) + 1, 128):
        if h % d == 0:
            best = d
    return best


def _plan(rows: int, h: int, itemsize: int, col_tiled: bool):
    """Pick (tile_rows, tile_cols, vmem_limit_bytes) from the VMEM budget."""
    vmem_cap = _vmem_capacity_bytes()
    budget = min(vmem_cap // 2, 64 * _MIB)          # leave pipeline headroom
    row_align = max(8, 32 // max(itemsize, 1))      # 8 f32, 16 bf16, 32 int8

    tc = _pick_col_tile(h) if col_tiled else h
    # Per grid step, double-buffered: gate + up + out tiles = 3 * tr * tc elems.
    bytes_per_row = 6 * tc * itemsize
    tr = max(row_align, (budget // bytes_per_row) // row_align * row_align)
    tr = min(tr, 1024, _round_up(rows, row_align))
    # Keep >= 2 row blocks when rows allow it (v7x has 2 TensorCores/chip).
    if rows > 2 * row_align and pl.cdiv(rows, tr) < 2:
        tr = max(row_align, _round_up(pl.cdiv(rows, 2), row_align))

    needed = 2 * 3 * tr * tc * itemsize
    vmem_limit = int(min(max(needed * 2 + 2 * _MIB, 32 * _MIB),
                         int(vmem_cap * 0.9)))
    return tr, tc, vmem_limit


def _silu_and_mul_split_kernel(gate_ref, up_ref, o_ref):
    # gate_ref/up_ref/o_ref: (tr, tc) tiles.
    gate = gate_ref[...].astype(jnp.float32)
    silu = gate * jax.nn.sigmoid(gate)
    o_ref[...] = silu.astype(o_ref.dtype) * up_ref[...]


def _silu_and_mul_fused_kernel(x_ref, o_ref):
    # Fallback path (H not a multiple of 128): x_ref is (tr, 2H), o_ref (tr, H).
    h = o_ref.shape[-1]
    gate = x_ref[:, :h].astype(jnp.float32)
    up = x_ref[:, h:]
    silu = gate * jax.nn.sigmoid(gate)
    o_ref[...] = silu.astype(o_ref.dtype) * up


def silu_and_mul(x: jax.Array) -> jax.Array:
    """Pallas implementation of SiluAndMul: silu(x[..., :H]) * x[..., H:]."""
    orig_shape = x.shape
    two_h = orig_shape[-1]
    assert two_h % 2 == 0, "last dim must be even"
    h = two_h // 2

    rows = 1
    for d in orig_shape[:-1]:
        rows *= d
    x2d = x.reshape(rows, two_h)
    itemsize = jnp.dtype(x.dtype).itemsize

    col_tiled = (h % 128 == 0)
    tr, tc, vmem_limit = _plan(rows, h, itemsize, col_tiled)

    n_row_blocks = pl.cdiv(rows, tr)
    cost = pl.CostEstimate(
        flops=4 * rows * h,
        transcendentals=rows * h,
        bytes_accessed=3 * rows * h * itemsize,
    )

    if col_tiled:
        n_col_blocks = h // tc
        out2d = pl.pallas_call(
            _silu_and_mul_split_kernel,
            out_shape=jax.ShapeDtypeStruct((rows, h), x.dtype),
            grid_spec=pltpu.PrefetchScalarGridSpec(
                num_scalar_prefetch=0,
                grid=(n_row_blocks, n_col_blocks),
                in_specs=[
                    # gate half: columns [0, H)
                    pl.BlockSpec((tr, tc), lambda i, j: (i, j)),
                    # up half: columns [H, 2H) -> block offset H // tc
                    pl.BlockSpec((tr, tc),
                                 lambda i, j, _n=n_col_blocks: (i, j + _n)),
                ],
                out_specs=pl.BlockSpec((tr, tc), lambda i, j: (i, j)),
            ),
            compiler_params=pltpu.CompilerParams(
                dimension_semantics=("parallel", "parallel"),
                vmem_limit_bytes=vmem_limit,
            ),
            cost_estimate=cost,
        )(x2d, x2d)
    else:
        # Small / irregular H: one block spans the full 2H width.
        out2d = pl.pallas_call(
            _silu_and_mul_fused_kernel,
            out_shape=jax.ShapeDtypeStruct((rows, h), x.dtype),
            grid_spec=pltpu.PrefetchScalarGridSpec(
                num_scalar_prefetch=0,
                grid=(n_row_blocks,),
                in_specs=[pl.BlockSpec((tr, two_h), lambda i: (i, 0))],
                out_specs=pl.BlockSpec((tr, h), lambda i: (i, 0)),
            ),
            compiler_params=pltpu.CompilerParams(
                dimension_semantics=("parallel",),
                vmem_limit_bytes=vmem_limit,
            ),
            cost_estimate=cost,
        )(x2d)

    return out2d.reshape(*orig_shape[:-1], h)


def _reference(x: jax.Array) -> jax.Array:
    h = x.shape[-1] // 2
    g, u = x[..., :h], x[..., h:]
    return jax.nn.silu(g.astype(jnp.float32)).astype(x.dtype) * u


if __name__ == "__main__":
    key = jax.random.PRNGKey(0)
    k1, k2 = jax.random.split(key)

    # Small shape implied by the module: batch=2, seq=8, hidden=32 -> 2H=64.
    x1 = jax.random.normal(k1, (2, 8, 64), dtype=jnp.float32)
    out1 = silu_and_mul(x1)
    jax.block_until_ready(out1)
    ref1 = _reference(x1)
    assert out1.shape == (2, 8, 32), out1.shape
    assert jnp.allclose(out1, ref1, atol=1e-5, rtol=1e-5), "f32 mismatch vs reference"

    # bf16 case exercising the column-tiled path + ragged row blocks
    # (rows = 120, not a multiple of the chosen row tile).
    x2 = jax.random.normal(k2, (3, 40, 512), dtype=jnp.bfloat16)
    out2 = silu_and_mul(x2)
    jax.block_until_ready(out2)
    ref2 = _reference(x2)
    assert out2.shape == (3, 40, 256), out2.shape
    assert jnp.allclose(out2.astype(jnp.float32), ref2.astype(jnp.float32),
                        atol=2e-2, rtol=2e-2), "bf16 mismatch vs reference"

    print("KERNEL_OK")
</pallas_src>

<mosaic_0001>
module attributes {stable_mosaic.version = 11 : i64} {
  func.func @_silu_and_mul_fused_kernel(%arg0: i32, %arg1: memref<16x64xf32, #tpu.memory_space<vmem>>, %arg2: memref<16x32xf32, #tpu.memory_space<vmem>>) attributes {dimension_semantics = [#tpu.dimension_semantics<parallel>], iteration_bounds = array<i64: 1>, scalar_prefetch = 0 : i64, scratch_operands = 0 : i64, tpu.core_type = #tpu.core_type<tc>, window_params = [{transform_indices = @transform_0, window_bounds = array<i64: 16, 64>}, {transform_indices = @transform_1, window_bounds = array<i64: 16, 32>}]} {
    %c0 = arith.constant 0 : index
    %c0_0 = arith.constant 0 : index
    %0 = vector.load %arg1[%c0, %c0_0] : memref<16x64xf32, #tpu.memory_space<vmem>>, vector<16x32xf32>
    %c0_1 = arith.constant 0 : index
    %c32 = arith.constant 32 : index
    %1 = vector.load %arg1[%c0_1, %c32] : memref<16x64xf32, #tpu.memory_space<vmem>>, vector<16x32xf32>
    %2 = arith.negf %0 : vector<16x32xf32>
    %3 = math.exp %2 : vector<16x32xf32>
    %cst = arith.constant 1.000000e+00 : f32
    %4 = vector.broadcast %cst : f32 to vector<16x32xf32>
    %5 = arith.addf %4, %3 : vector<16x32xf32>
    %6 = arith.divf %4, %5 : vector<16x32xf32>
    %7 = arith.mulf %0, %6 : vector<16x32xf32>
    %8 = arith.mulf %7, %1 : vector<16x32xf32>
    %c0_2 = arith.constant 0 : index
    %c0_3 = arith.constant 0 : index
    %9 = vector.load %arg2[%c0_2, %c0_3] : memref<16x32xf32, #tpu.memory_space<vmem>>, vector<16x32xf32>
    tpu.vector_store %arg2[%c0_2, %c0_3], %8 {strides = array<i32>} : memref<16x32xf32, #tpu.memory_space<vmem>>, vector<16x32xf32>,
    return
  }
  func.func @transform_0(%arg0: i32) -> (i32, i32) {
    %c0_i32 = arith.constant 0 : i32
    %c0_i32_0 = arith.constant 0 : i32
    return %arg0, %c0_i32 : i32, i32
  }
  func.func @transform_1(%arg0: i32) -> (i32, i32) {
    %c0_i32 = arith.constant 0 : i32
    %c0_i32_0 = arith.constant 0 : i32
    return %arg0, %c0_i32 : i32, i32
  }
}

</mosaic_0001>

<llo_original>
// kernel: tpu_custom_call.1
$region0: #{tpu_custom_call.1}
  #allocation0 [shape = 'u32[]', space=smem, size = 0x4, offset = 0x4, fixed_abs, tag = 'smem constant byte address 0x4 - core index']
  #allocation1 [shape = 'u32[144,128]{1,0:T(1,128)}', space=vmem, size = 0x12000, scoped, tag = 'internal scratch']
  %s0 = inlined_call_operand.hbm [shape: f32[16,64], index: 0, kind: input, shape index: {}]
  %s1 = inlined_call_operand.hbm [shape: f32[16,32], index: 1, kind: output, shape index: {}]
  %s2 = sld [smem:[#allocation0]]
  $region18: #{tpu_custom_call.1} parent=0
    _
  %s4 = ssub.s32 1, %s2
  %s5 = scalar_select 0, %s4, %s2
  $region1: #{tpu_custom_call.1} parent=0
    #allocation2 [shape = 'u8[8192]{0}', space=vmem, size = 0x2000, scoped, tag = 'input window, operand 0, single buffered']
    #allocation3 [shape = 's32[1]{0}', space=sflag, size = 0x4, scoped, tag = 'scoped memory for tpu_custom_call.1']
    #allocation4 [shape = 's32[1]{0}', space=sflag, size = 0x4, scoped, tag = 'scoped memory for tpu_custom_call.1']
    #allocation5 [shape = 'u8[8192]{0}', space=vmem, size = 0x2000, scoped, tag = 'output window, operand 0, single buffered']
    %6 = vsyncpa [#allocation3], 0
    %7 = vsyncpa [#allocation4], 0
    // Predicated region
    $region2: #{tpu_custom_call.1} parent=1 // pred_check
      _
    $region3: #{tpu_custom_call.1} parent=1 // pred_check_branch
      %9 = sbr.rel (0) target = $region5
    $region4: #{tpu_custom_call.1} parent=1 // pred_region
      %s11 = ssub.s32 256, 256
      %12 = vsyncadd [#allocation3], %s11
      %s13 = sshll.u32 [#allocation2], 4
      %s14 = int_to_ptr.vmem [resolvable:$true] %s13
      %19 = dma.hbm_to_vmem [thread:$0]  %s0, 256, %s14, [#allocation3], 128, 128, 8
    $region5: #{tpu_custom_call.1} parent=1 // pred_fallthru
      _
    // Predicated region
    $region6: #{tpu_custom_call.1} parent=1 // pred_check
      _
    $region7: #{tpu_custom_call.1} parent=1 // pred_check_branch
      %21 = sbr.rel (0) target = $region9
    $region8: #{tpu_custom_call.1} parent=1 // pred_region
      %22 = dma.done [#allocation3], 256
    $region9: #{tpu_custom_call.1} parent=1 // pred_fallthru
      _
    %v23 = vld [vmem:[#allocation2] sm:$0xff]
    %v24 = vld [vmem:[#allocation2 + $0x8] sm:$0xff]
    %v25 = vxor.u32 %v23, 2147483648
    %v26 = vxor.u32 %v24, 2147483648
    %v27 = vmul.f32 %v25, 1.442695
    %v28 = vpow.pop %v27
    %v29 = vmul.f32 %v26, 1.442695
    %v30 = vpow.pop %v29
    %v31 = vadd.f32 %v28, 1.0
    %v32 = vadd.f32 %v30, 1.0
    %v33 = vrcp.pop %v31
    %v34 = vmul.f32 1.0, %v33
    %v35 = vrcp.pop %v32
    %v36 = vmul.f32 1.0, %v35
    %v37 = vmul.f32 %v23, %v34
    %v38 = vmul.f32 %v24, %v36
    %41 = vrot.lane.b32.xlu0 %v23, 96
    %v42 = vpop.permute.xlu0 %41
    %43 = vrot.lane.b32.xlu0 %v24, 96
    %v44 = vpop.permute.xlu0 %43
    %v47 = vmul.f32 %v37, %v42
    %v48 = vmul.f32 %v38, %v44
    %vm49 = vcmask 261120
    %50 = vst.msk [vmem:[#allocation5] sm:$0xff] %vm49, %v47
    %51 = vst.msk [vmem:[#allocation5 + $0x8] sm:$0xff] %vm49, %v48
    // Predicated region
    $region10: #{tpu_custom_call.1} parent=1 // pred_check
      _
    $region11: #{tpu_custom_call.1} parent=1 // pred_check_branch
      %53 = sbr.rel (0) target = $region13
    $region12: #{tpu_custom_call.1} parent=1 // pred_region
      %s55 = ssub.s32 256, 256
      %56 = vsyncadd [#allocation4], %s55
      %s57 = sshll.u32 [#allocation5], 4
      %s58 = int_to_ptr.vmem [resolvable:$true] %s57
      %63 = dma.vmem_to_hbm [thread:$0]  %s58, 256, %s1, [#allocation4], 128, 128, 8
    $region13: #{tpu_custom_call.1} parent=1 // pred_fallthru
      _
    // Predicated region
    $region14: #{tpu_custom_call.1} parent=1 // pred_check
      _
    $region15: #{tpu_custom_call.1} parent=1 // pred_check_branch
      %65 = sbr.rel (0) target = $region17
    $region16: #{tpu_custom_call.1} parent=1 // pred_region
      %66 = dma.done [#allocation4], 256
    $region17: #{tpu_custom_call.1} parent=1 // pred_fallthru
      _
    %67 = vsyncpa [#allocation3], 1
    %68 = vsyncpa [#allocation4], 1

</llo_original>
